<compile_context>
chip_gen: v7x
topology: tpu7x:2x2x1
jax: 0.10.0
libtpu: 0.0.40
codegen_flags: <defaults>
</compile_context>

<pallas_src>
import jax
import jax.numpy as jnp
from jax.experimental import pallas as pl
from jax.experimental.pallas import tpu as pltpu


def _se_kernel(x_ref, w1_ref, b1_ref, w2_ref, b2_ref, o_ref):
    # x_ref: (bs, C, HW)   w1_ref: (C, Cr) [pre-scaled by 1/HW]   b1_ref: (1, Cr)
    # w2_ref: (Cr, C)      b2_ref: (1, C)  o_ref: (bs, C, HW)
    x = x_ref[...]                                           # native dtype

    # Global average pool: lane-axis sum with f32 accumulation.
    # (1/HW is already folded into w1, so a plain sum is exact-equivalent.)
    pooled = jnp.sum(x, axis=-1, dtype=jnp.float32)          # (bs, C)

    # squeeze: Linear(C -> Cr) + ReLU (f32)
    h = jnp.dot(pooled, w1_ref[...], preferred_element_type=jnp.float32)
    h = jnp.maximum(h + b1_ref[...], 0.0)                    # (bs, Cr)

    # extract: Linear(Cr -> C) + sigmoid (f32)
    s = jnp.dot(h, w2_ref[...], preferred_element_type=jnp.float32)
    s = jax.nn.sigmoid(s + b2_ref[...])                      # (bs, C)

    # Per-channel rescale in the input dtype (no f32 copy of the slab).
    o_ref[...] = (x * s.astype(x.dtype)[:, :, None]).astype(o_ref.dtype)


def se_layer(x, w1, b1, w2, b2, *, block_b=None):
    """SE block forward.

    x:  (B, C, H, W)
    w1: (C, Cr)  squeeze weight (transposed vs. torch.nn.Linear.weight)
    b1: (Cr,)    squeeze bias
    w2: (Cr, C)  extract weight (transposed vs. torch.nn.Linear.weight)
    b2: (C,)     extract bias
    """
    B, C, H, W = x.shape
    HW = H * W
    Cr = w1.shape[1]

    # Lane-dense layout: flatten spatial dims (free row-major reshape).
    x3 = x.reshape(B, C, HW)

    # Pick a per-block batch size: keep one x slab to ~4 MiB so that
    # 2 (double buffer) x 2 (in + out) x slab stays well inside the scoped
    # VMEM limit on every generation (v7x has only 64 MiB physical VMEM).
    if block_b is None:
        bytes_per_sample = C * HW * x.dtype.itemsize
        budget = 4 * 1024 * 1024
        block_b = max(1, min(B, budget // max(bytes_per_sample, 1)))
        while B % block_b != 0:          # clean tiling (no partial blocks)
            block_b -= 1
    grid = (B // block_b,)

    # Fold the average-pool scale into the squeeze weight (linearity => exact).
    w1_scaled = (w1.astype(jnp.float32) / jnp.float32(HW))

    out3 = pl.pallas_call(
        _se_kernel,
        out_shape=jax.ShapeDtypeStruct((B, C, HW), x.dtype),
        grid=grid,
        in_specs=[
            pl.BlockSpec((block_b, C, HW), lambda b: (b, 0, 0)),   # x slab
            pl.BlockSpec((C, Cr), lambda b: (0, 0)),               # w1 (const)
            pl.BlockSpec((1, Cr), lambda b: (0, 0)),               # b1 (const)
            pl.BlockSpec((Cr, C), lambda b: (0, 0)),               # w2 (const)
            pl.BlockSpec((1, C), lambda b: (0, 0)),                # b2 (const)
        ],
        out_specs=pl.BlockSpec((block_b, C, HW), lambda b: (b, 0, 0)),
        compiler_params=pltpu.CompilerParams(
            dimension_semantics=("parallel",),
        ),
    )(
        x3,
        w1_scaled,
        b1.astype(jnp.float32).reshape(1, Cr),
        w2.astype(jnp.float32),
        b2.astype(jnp.float32).reshape(1, C),
    )
    return out3.reshape(B, C, H, W)


def se_layer_ref(x, w1, b1, w2, b2):
    pooled = jnp.mean(x.astype(jnp.float32), axis=(2, 3))
    h = jax.nn.relu(pooled @ w1 + b1)
    s = jax.nn.sigmoid(h @ w2 + b2)
    return (x * s[:, :, None, None].astype(x.dtype)).astype(x.dtype)


if __name__ == "__main__":
    # Small shapes consistent with the module: ch=32, reduction_ratio=16 -> c_=2
    B, C, H, W = 2, 32, 16, 16
    Cr = C // 16

    key = jax.random.PRNGKey(0)
    kx, k1, k2, k3, k4 = jax.random.split(key, 5)

    x = jax.random.normal(kx, (B, C, H, W), dtype=jnp.float32)
    # Deterministic synthetic parameters (shapes from SELayer.__init__)
    w1 = jax.random.normal(k1, (C, Cr), dtype=jnp.float32) * 0.1   # squeeze weight^T
    b1 = jax.random.normal(k2, (Cr,), dtype=jnp.float32) * 0.1     # squeeze bias
    w2 = jax.random.normal(k3, (Cr, C), dtype=jnp.float32) * 0.1   # extract weight^T
    b2 = jax.random.normal(k4, (C,), dtype=jnp.float32) * 0.1      # extract bias

    out = se_layer(x, w1, b1, w2, b2)
    out = jax.block_until_ready(out)

    ref = se_layer_ref(x, w1, b1, w2, b2)
    assert out.shape == (B, C, H, W)
    assert jnp.allclose(out, ref, atol=1e-5, rtol=1e-5), "mismatch vs JAX reference"

    print("KERNEL_OK")
</pallas_src>

<mosaic_0001>
module attributes {stable_mosaic.version = 11 : i64} {
  func.func @_se_kernel(%arg0: i32, %arg1: memref<2x32x256xf32, #tpu.memory_space<vmem>>, %arg2: memref<32x2xf32, #tpu.memory_space<vmem>>, %arg3: memref<1x2xf32, #tpu.memory_space<vmem>>, %arg4: memref<2x32xf32, #tpu.memory_space<vmem>>, %arg5: memref<1x32xf32, #tpu.memory_space<vmem>>, %arg6: memref<2x32x256xf32, #tpu.memory_space<vmem>>) attributes {dimension_semantics = [#tpu.dimension_semantics<parallel>], iteration_bounds = array<i64: 1>, scalar_prefetch = 0 : i64, scratch_operands = 0 : i64, tpu.core_type = #tpu.core_type<tc>, window_params = [{transform_indices = @transform_0, window_bounds = array<i64: 2, 32, 256>}, {pipeline_mode = #tpu.pipeline_mode<synchronous>, transform_indices = @transform_1, window_bounds = array<i64: 32, 2>}, {pipeline_mode = #tpu.pipeline_mode<synchronous>, transform_indices = @transform_2, window_bounds = array<i64: 1, 2>}, {pipeline_mode = #tpu.pipeline_mode<synchronous>, transform_indices = @transform_3, window_bounds = array<i64: 2, 32>}, {pipeline_mode = #tpu.pipeline_mode<synchronous>, transform_indices = @transform_4, window_bounds = array<i64: 1, 32>}, {transform_indices = @transform_5, window_bounds = array<i64: 2, 32, 256>}]} {
    %c0 = arith.constant 0 : index
    %c0_0 = arith.constant 0 : index
    %c0_1 = arith.constant 0 : index
    %0 = vector.load %arg1[%c0, %c0_0, %c0_1] : memref<2x32x256xf32, #tpu.memory_space<vmem>>, vector<2x32x256xf32>
    %cst = arith.constant dense<0.000000e+00> : vector<2x32xf32>
    %1 = vector.multi_reduction <add>, %0, %cst [2] : vector<2x32x256xf32> to vector<2x32xf32>
    %c0_2 = arith.constant 0 : index
    %c0_3 = arith.constant 0 : index
    %2 = vector.load %arg2[%c0_2, %c0_3] : memref<32x2xf32, #tpu.memory_space<vmem>>, vector<32x2xf32>
    %cst_4 = arith.constant dense<0.000000e+00> : vector<2x2xf32>
    %3 = tpu.matmul %1, %2, %cst_4 {dimension_numbers = #tpu.dot_dimension_numbers<[1], [0], [0], [1], [0, 0, 1, 1], [], []>} : vector<2x32xf32>, vector<32x2xf32>, vector<2x2xf32> -> vector<2x2xf32>
    %c0_5 = arith.constant 0 : index
    %c0_6 = arith.constant 0 : index
    %4 = vector.load %arg3[%c0_5, %c0_6] : memref<1x2xf32, #tpu.memory_space<vmem>>, vector<1x2xf32>
    %5 = vector.broadcast %4 : vector<1x2xf32> to vector<2x2xf32>
    %6 = arith.addf %3, %5 : vector<2x2xf32>
    %cst_7 = arith.constant 0.000000e+00 : f32
    %7 = vector.broadcast %cst_7 : f32 to vector<2x2xf32>
    %8 = arith.maximumf %6, %7 : vector<2x2xf32>
    %c0_8 = arith.constant 0 : index
    %c0_9 = arith.constant 0 : index
    %9 = vector.load %arg4[%c0_8, %c0_9] : memref<2x32xf32, #tpu.memory_space<vmem>>, vector<2x32xf32>
    %cst_10 = arith.constant dense<0.000000e+00> : vector<2x32xf32>
    %10 = tpu.matmul %8, %9, %cst_10 {dimension_numbers = #tpu.dot_dimension_numbers<[1], [0], [0], [1], [0, 0, 1, 1], [], []>} : vector<2x2xf32>, vector<2x32xf32>, vector<2x32xf32> -> vector<2x32xf32>
    %c0_11 = arith.constant 0 : index
    %c0_12 = arith.constant 0 : index
    %11 = vector.load %arg5[%c0_11, %c0_12] : memref<1x32xf32, #tpu.memory_space<vmem>>, vector<1x32xf32>
    %12 = vector.broadcast %11 : vector<1x32xf32> to vector<2x32xf32>
    %13 = arith.addf %10, %12 : vector<2x32xf32>
    %14 = arith.negf %13 : vector<2x32xf32>
    %15 = math.exp %14 : vector<2x32xf32>
    %cst_13 = arith.constant 1.000000e+00 : f32
    %16 = vector.broadcast %cst_13 : f32 to vector<2x32xf32>
    %17 = arith.addf %16, %15 : vector<2x32xf32>
    %18 = arith.divf %16, %17 : vector<2x32xf32>
    %19 = vector.shape_cast %18 : vector<2x32xf32> to vector<2x32x1xf32>
    %20 = vector.broadcast %19 : vector<2x32x1xf32> to vector<2x32x256xf32>
    %21 = arith.mulf %0, %20 : vector<2x32x256xf32>
    %c0_14 = arith.constant 0 : index
    %c0_15 = arith.constant 0 : index
    %c0_16 = arith.constant 0 : index
    %22 = vector.load %arg6[%c0_14, %c0_15, %c0_16] : memref<2x32x256xf32, #tpu.memory_space<vmem>>, vector<2x32x256xf32>
    tpu.vector_store %arg6[%c0_14, %c0_15, %c0_16], %21 {strides = array<i32>} : memref<2x32x256xf32, #tpu.memory_space<vmem>>, vector<2x32x256xf32>,
    return
  }
  func.func @transform_0(%arg0: i32) -> (i32, i32, i32) {
    %c0_i32 = arith.constant 0 : i32
    %c0_i32_0 = arith.constant 0 : i32
    %c0_i32_1 = arith.constant 0 : i32
    return %arg0, %c0_i32, %c0_i32_0 : i32, i32, i32
  }
  func.func @transform_1(%arg0: i32) -> (i32, i32) {
    %c0_i32 = arith.constant 0 : i32
    %c0_i32_0 = arith.constant 0 : i32
    %c0_i32_1 = arith.constant 0 : i32
    return %c0_i32, %c0_i32_0 : i32, i32
  }
  func.func @transform_2(%arg0: i32) -> (i32, i32) {
    %c0_i32 = arith.constant 0 : i32
    %c0_i32_0 = arith.constant 0 : i32
    %c0_i32_1 = arith.constant 0 : i32
    return %c0_i32, %c0_i32_0 : i32, i32
  }
  func.func @transform_3(%arg0: i32) -> (i32, i32) {
    %c0_i32 = arith.constant 0 : i32
    %c0_i32_0 = arith.constant 0 : i32
    %c0_i32_1 = arith.constant 0 : i32
    return %c0_i32, %c0_i32_0 : i32, i32
  }
  func.func @transform_4(%arg0: i32) -> (i32, i32) {
    %c0_i32 = arith.constant 0 : i32
    %c0_i32_0 = arith.constant 0 : i32
    %c0_i32_1 = arith.constant 0 : i32
    return %c0_i32, %c0_i32_0 : i32, i32
  }
  func.func @transform_5(%arg0: i32) -> (i32, i32, i32) {
    %c0_i32 = arith.constant 0 : i32
    %c0_i32_0 = arith.constant 0 : i32
    %c0_i32_1 = arith.constant 0 : i32
    return %arg0, %c0_i32, %c0_i32_0 : i32, i32, i32
  }
}

</mosaic_0001>

<llo_original>
// kernel: tpu_custom_call.1
$region0: #{tpu_custom_call.1}
  #allocation0 [shape = 'u32[]', space=smem, size = 0x4, offset = 0x4, fixed_abs, tag = 'smem constant byte address 0x4 - core index']
  #allocation1 [shape = 'u32[144,128]{1,0:T(1,128)}', space=vmem, size = 0x12000, scoped, tag = 'internal scratch']
  %s0 = inlined_call_operand.hbm [shape: f32[2,32,256], index: 0, kind: input, shape index: {}]
  %s1 = inlined_call_operand.vmem [shape: f32[32,2], index: 1, kind: input, shape index: {}]
  %s2 = inlined_call_operand.vmem [shape: f32[1,2], index: 2, kind: input, shape index: {}]
  %s3 = inlined_call_operand.vmem [shape: f32[2,32], index: 3, kind: input, shape index: {}]
  %s4 = inlined_call_operand.vmem [shape: f32[1,32], index: 4, kind: input, shape index: {}]
  %s5 = inlined_call_operand.hbm [shape: f32[2,32,256], index: 5, kind: output, shape index: {}]
  %s6 = sld [smem:[#allocation0]]
  $region34: #{tpu_custom_call.1} parent=0
    _
  %s8 = ssub.s32 1, %s6
  %s9 = scalar_select 0, %s8, %s6
  $region1: #{tpu_custom_call.1} parent=0
    #allocation2 [shape = 'u8[65536]{0}', space=vmem, size = 0x10000, scoped, tag = 'input window, operand 0, single buffered']
    #allocation3 [shape = 's32[1]{0}', space=sflag, size = 0x4, scoped, tag = 'scoped memory for tpu_custom_call.1']
    #allocation4 [shape = 's32[1]{0}', space=sflag, size = 0x4, scoped, tag = 'scoped memory for tpu_custom_call.1']
    #allocation5 [shape = 'u8[65536]{0}', space=vmem, size = 0x10000, scoped, tag = 'output window, operand 0, single buffered']
    %10 = vsyncpa [#allocation3], 0
    %11 = vsyncpa [#allocation4], 0
    // Predicated region
    $region2: #{tpu_custom_call.1} parent=1 // pred_check
      _
    $region3: #{tpu_custom_call.1} parent=1 // pred_check_branch
      %13 = sbr.rel (0) target = $region5
    $region4: #{tpu_custom_call.1} parent=1 // pred_region
      %s15 = ssub.s32 2048, 2048
      %16 = vsyncadd [#allocation3], %s15
      %s17 = sshll.u32 [#allocation2], 4
      %s18 = int_to_ptr.vmem [resolvable:$true] %s17
      %23 = dma.hbm_to_vmem [thread:$0]  %s0, 2048, %s18, [#allocation3], 256, 256, 16
    $region5: #{tpu_custom_call.1} parent=1 // pred_fallthru
      _
    // Predicated region
    $region6: #{tpu_custom_call.1} parent=1 // pred_check
      _
    $region7: #{tpu_custom_call.1} parent=1 // pred_check_branch
      %25 = sbr.rel (0) target = $region9
    $region8: #{tpu_custom_call.1} parent=1 // pred_region
      _
    $region9: #{tpu_custom_call.1} parent=1 // pred_fallthru
      _
    // Predicated region
    $region10: #{tpu_custom_call.1} parent=1 // pred_check
      _
    $region11: #{tpu_custom_call.1} parent=1 // pred_check_branch
      %27 = sbr.rel (0) target = $region13
    $region12: #{tpu_custom_call.1} parent=1 // pred_region
      _
    $region13: #{tpu_custom_call.1} parent=1 // pred_fallthru
      _
    // Predicated region
    $region14: #{tpu_custom_call.1} parent=1 // pred_check
      _
    $region15: #{tpu_custom_call.1} parent=1 // pred_check_branch
      %29 = sbr.rel (0) target = $region17
    $region16: #{tpu_custom_call.1} parent=1 // pred_region
      _
    $region17: #{tpu_custom_call.1} parent=1 // pred_fallthru
      _
    // Predicated region
    $region18: #{tpu_custom_call.1} parent=1 // pred_check
      _
    $region19: #{tpu_custom_call.1} parent=1 // pred_check_branch
      %31 = sbr.rel (0) target = $region21
    $region20: #{tpu_custom_call.1} parent=1 // pred_region
      _
    $region21: #{tpu_custom_call.1} parent=1 // pred_fallthru
      _
    // Predicated region
    $region22: #{tpu_custom_call.1} parent=1 // pred_check
      _
    $region23: #{tpu_custom_call.1} parent=1 // pred_check_branch
      %33 = sbr.rel (0) target = $region25
    $region24: #{tpu_custom_call.1} parent=1 // pred_region
      %34 = dma.done [#allocation3], 2048
    $region25: #{tpu_custom_call.1} parent=1 // pred_fallthru
      _
    %v35 = vld [vmem:[#allocation2] sm:$0xff]
    %v36 = vld [vmem:[#allocation2 + $0x8] sm:$0xff]
    %v37 = vld [vmem:[#allocation2 + $0x10] sm:$0xff]
    %v38 = vld [vmem:[#allocation2 + $0x18] sm:$0xff]
    %v39 = vld [vmem:[#allocation2 + $0x20] sm:$0xff]
    %v40 = vld [vmem:[#allocation2 + $0x28] sm:$0xff]
    %v41 = vld [vmem:[#allocation2 + $0x30] sm:$0xff]
    %v42 = vld [vmem:[#allocation2 + $0x38] sm:$0xff]
    %v43 = vld [vmem:[#allocation2 + $0x40] sm:$0xff]
    %v44 = vld [vmem:[#allocation2 + $0x48] sm:$0xff]
    %v45 = vld [vmem:[#allocation2 + $0x50] sm:$0xff]
    %v46 = vld [vmem:[#allocation2 + $0x58] sm:$0xff]
    %v47 = vld [vmem:[#allocation2 + $0x60] sm:$0xff]
    %v48 = vld [vmem:[#allocation2 + $0x68] sm:$0xff]
    %v49 = vld [vmem:[#allocation2 + $0x70] sm:$0xff]
    %v50 = vld [vmem:[#allocation2 + $0x78] sm:$0xff]
    %v51 = vadd.f32 %v35, %v36
    %52 = vadd.xlane.f32.xlu0 %v51
    %v53 = vpop.xlane.xlu0 %52
    %v54 = vadd.f32 %v37, %v38
    %55 = vadd.xlane.f32.xlu0 %v54
    %v56 = vpop.xlane.xlu0 %55
    %v57 = vadd.f32 %v39, %v40
    %58 = vadd.xlane.f32.xlu0 %v57
    %v59 = vpop.xlane.xlu0 %58
    %v60 = vadd.f32 %v41, %v42
    %61 = vadd.xlane.f32.xlu0 %v60
    %v62 = vpop.xlane.xlu0 %61
    %v63 = vadd.f32 %v43, %v44
    %64 = vadd.xlane.f32.xlu0 %v63
    %v65 = vpop.xlane.xlu0 %64
    %v66 = vadd.f32 %v45, %v46
    %67 = vadd.xlane.f32.xlu0 %v66
    %v68 = vpop.xlane.xlu0 %67
    %v69 = vadd.f32 %v47, %v48
    %70 = vadd.xlane.f32.xlu0 %v69
    %v71 = vpop.xlane.xlu0 %70
    %v72 = vadd.f32 %v49, %v50
    %73 = vadd.xlane.f32.xlu0 %v72
    %v74 = vpop.xlane.xlu0 %73
    %v75 = vld [vmem:[%s1] sm:$0xff]
    %v76 = vld [vmem:[%s1 + $0x8] sm:$0xff]
    %v77 = vld [vmem:[%s1 + $0x10] sm:$0xff]
    %v78 = vld [vmem:[%s1 + $0x18] sm:$0xff]
    %v79 = vld [vmem:[%s2] sm:$0x1]
    %v81 = vlaneseq
    %v82 = vshrl.u32 %v81, 7
    %v83 = vsub.s32 0, %v82
    %v84 = vrot.slane %v79, %v83
    %v94 = vlaneseq
    %v95 = vand.u32 %v94, 127
    %v96 = vlaneseq
    %v97 = vshrl.u32 %v96, 7
    %v98 = vsub.s32 %v95, %v97
    %v99 = vrot.slane %v53, %v98
    %v100 = vadd.s32 %v95, 4294967288
    %v101 = vlaneseq
    %v102 = vshrl.u32 %v101, 7
    %v103 = vsub.s32 %v100, %v102
    %v104 = vrot.slane %v56, %v103
    %vm105 = vcmask 130112
    %v106 = vsel %vm105, %v104, %v99
    %v107 = vadd.s32 %v95, 4294967280
    %v108 = vlaneseq
    %v109 = vshrl.u32 %v108, 7
    %v110 = vsub.s32 %v107, %v109
    %v111 = vrot.slane %v59, %v110
    %vm112 = vcmask 195712
    %v113 = vsel %vm112, %v111, %v106
    %v114 = vadd.s32 %v95, 4294967272
    %v115 = vlaneseq
    %v116 = vshrl.u32 %v115, 7
    %v117 = vsub.s32 %v114, %v116
    %v118 = vrot.slane %v62, %v117
    %vm119 = vcmask 261312
    %v120 = vsel %vm119, %v118, %v113
    %v121 = vlaneseq
    %v122 = vshrl.u32 %v121, 7
    %v123 = vsub.s32 %v95, %v122
    %v124 = vrot.slane %v65, %v123
    %v125 = vlaneseq
    %v126 = vshrl.u32 %v125, 7
    %v127 = vsub.s32 %v100, %v126
    %v128 = vrot.slane %v68, %v127
    %v129 = vsel %vm105, %v128, %v124
    %v130 = vlaneseq
    %v131 = vshrl.u32 %v130, 7
    %v132 = vsub.s32 %v107, %v131
    %v133 = vrot.slane %v71, %v132
    %v134 = vsel %vm112, %v133, %v129
    %v135 = vlaneseq
    %v136 = vshrl.u32 %v135, 7
    %v137 = vsub.s32 %v114, %v136
    %v138 = vrot.slane %v74, %v137
    %v139 = vsel %vm119, %v138, %v134
    %vm140 = vcmask 1041409
    %v141 = vsel %vm140, %v139, %v120
    %vm142 = vcmask 261120
    %v143 = vsel %vm142, %v141, 0
    %145 = vmatprep.subr.mxu0 0.0
    %146 = vmatpush1.msra.mxu0 %v75
    %147 = vmatprep.subr.mxu0 0.0
    %148 = vmatpush1.msra.mxu0 %v76
    %149 = vmatprep.subr.mxu0 0.0
    %150 = vmatpush1.msra.mxu0 %v77
    %151 = vmatprep.subr.mxu0 0.0
    %152 = vmatpush1.msra.mxu0 %v78
    %153 = vmatprep.subr.mxu0 0.0
    %154 = vmatpush1.msra.mxu0 0.0
    %155 = vmatprep.subr.mxu0 0.0
    %156 = vmatpush1.msra.mxu0 0.0
    %157 = vmatprep.subr.mxu0 0.0
    %158 = vmatpush1.msra.mxu0 0.0
    %159 = vmatprep.subr.mxu0 0.0
    %160 = vmatpush1.msra.mxu0 0.0
    %161 = vmatprep.subr.mxu0 0.0
    %162 = vmatpush1.msra.mxu0 0.0
    %163 = vmatprep.subr.mxu0 0.0
    %164 = vmatpush1.msra.mxu0 0.0
    %165 = vmatprep.subr.mxu0 0.0
    %166 = vmatpush1.msra.mxu0 0.0
    %167 = vmatprep.subr.mxu0 0.0
    %168 = vmatpush1.msra.mxu0 0.0
    %169 = vmatprep.subr.mxu0 0.0
    %170 = vmatpush1.msra.mxu0 0.0
    %171 = vmatprep.subr.mxu0 0.0
    %172 = vmatpush1.msra.mxu0 0.0
    %173 = vmatprep.subr.mxu0 0.0
    %174 = vmatpush1.msra.mxu0 0.0
    %175 = vmatprep.subr.mxu0 0.0
    %176 = vmatpush1.msra.mxu0 0.0
    %177 = vmatprep.subr.mxu0 0.0
    %178 = vmatpush1.msra.mxu0 0.0
    %179 = vmatprep.subr.mxu0 0.0
    %180 = vmatpush1.msra.mxu0 0.0
    %181 = vmatprep.subr.mxu0 0.0
    %182 = vmatpush1.msra.mxu0 0.0
    %183 = vmatprep.subr.mxu0 0.0
    %184 = vmatpush1.msra.mxu0 0.0
    %185 = vmatprep.subr.mxu0 0.0
    %186 = vmatpush1.msra.mxu0 0.0
    %187 = vmatprep.subr.mxu0 0.0
    %188 = vmatpush1.msra.mxu0 0.0
    %189 = vmatprep.subr.mxu0 0.0
    %190 = vmatpush1.msra.mxu0 0.0
    %191 = vmatprep.subr.mxu0 0.0
    %192 = vmatpush1.msra.mxu0 0.0
    %193 = vmatprep.subr.mxu0 0.0
    %194 = vmatpush1.msra.mxu0 0.0
    %195 = vmatprep.subr.mxu0 0.0
    %196 = vmatpush1.msra.mxu0 0.0
    %197 = vmatprep.subr.mxu0 0.0
    %198 = vmatpush1.msra.mxu0 0.0
    %199 = vmatprep.subr.mxu0 0.0
    %200 = vmatpush1.msra.mxu0 0.0
    %201 = vmatprep.subr.mxu0 0.0
    %202 = vmatpush1.msra.mxu0 0.0
    %203 = vmatprep.subr.mxu0 0.0
    %204 = vmatpush1.msra.mxu0 0.0
    %205 = vmatprep.subr.mxu0 0.0
    %206 = vmatpush1.msra.mxu0 0.0
    %207 = vmatprep.subr.mxu0 0.0
    %208 = vmatpush1.msra.mxu0 0.0
    %209 = vmatprep.mubr.f32.mxu0 0.0
    %210 = vmatmul.mubr.f32.gmra.mrb[0].mxu0 %v143
    %v211 = vpop.f32.mrb[0].mxu0
    %v212 = vadd.f32 %v84, %v211
    %v213 = vpop.f32.mrb[0].mxu0
    %214 = vdwg.mxu0
    %v215 = vmax.f32 %v212, 0.0
    %v216 = vld [vmem:[%s3] sm:$0x3]
    %v217 = vld [vmem:[%s4] sm:$0x1]
    %v219 = vlaneseq
    %v220 = vshrl.u32 %v219, 7
    %v221 = vsub.s32 0, %v220
    %v222 = vrot.slane %v217, %v221
    %vm224 = vcmask 15360
    %v226 = vsel %vm224, %v215, 0
    %vm228 = vcmask 1041408
    %v230 = vsel %vm228, %v216, 0
    %232 = vmatprep.subr.mxu0 0.0
    %233 = vmatpush1.msra.mxu0 %v230
    %234 = vmatprep.subr.mxu0 0.0
    %235 = vmatpush1.msra.mxu0 0.0
    %236 = vmatprep.subr.mxu0 0.0
    %237 = vmatpush1.msra.mxu0 0.0
    %238 = vmatprep.subr.mxu0 0.0
    %239 = vmatpush1.msra.mxu0 0.0
    %240 = vmatprep.subr.mxu0 0.0
    %241 = vmatpush1.msra.mxu0 0.0
    %242 = vmatprep.subr.mxu0 0.0
    %243 = vmatpush1.msra.mxu0 0.0
    %244 = vmatprep.subr.mxu0 0.0
    %245 = vmatpush1.msra.mxu0 0.0
    %246 = vmatprep.subr.mxu0 0.0
    %247 = vmatpush1.msra.mxu0 0.0
    %248 = vmatprep.subr.mxu0 0.0
    %249 = vmatpush1.msra.mxu0 0.0
    %250 = vmatprep.subr.mxu0 0.0
    %251 = vmatpush1.msra.mxu0 0.0
    %252 = vmatprep.subr.mxu0 0.0
    %253 = vmatpush1.msra.mxu0 0.0
    %254 = vmatprep.subr.mxu0 0.0
    %255 = vmatpush1.msra.mxu0 0.0
    %256 = vmatprep.subr.mxu0 0.0
    %257 = vmatpush1.msra.mxu0 0.0
    %258 = vmatprep.subr.mxu0 0.0
    %259 = vmatpush1.msra.mxu0 0.0
    %260 = vmatprep.subr.mxu0 0.0
    %261 = vmatpush1.msra.mxu0 0.0
    %262 = vmatprep.subr.mxu0 0.0
    %263 = vmatpush1.msra.mxu0 0.0
    %264 = vmatprep.subr.mxu0 0.0
    %265 = vmatpush1.msra.mxu0 0.0
    %266 = vmatprep.subr.mxu0 0.0
    %267 = vmatpush1.msra.mxu0 0.0
    %268 = vmatprep.subr.mxu0 0.0
    %269 = vmatpush1.msra.mxu0 0.0
    %270 = vmatprep.subr.mxu0 0.0
    %271 = vmatpush1.msra.mxu0 0.0
    %272 = vmatprep.subr.mxu0 0.0
    %273 = vmatpush1.msra.mxu0 0.0
    %274 = vmatprep.subr.mxu0 0.0
    %275 = vmatpush1.msra.mxu0 0.0
    %276 = vmatprep.subr.mxu0 0.0
    %277 = vmatpush1.msra.mxu0 0.0
    %278 = vmatprep.subr.mxu0 0.0
    %279 = vmatpush1.msra.mxu0 0.0
    %280 = vmatprep.subr.mxu0 0.0
    %281 = vmatpush1.msra.mxu0 0.0
    %282 = vmatprep.subr.mxu0 0.0
    %283 = vmatpush1.msra.mxu0 0.0
    %284 = vmatprep.subr.mxu0 0.0
    %285 = vmatpush1.msra.mxu0 0.0
    %286 = vmatprep.subr.mxu0 0.0
    %287 = vmatpush1.msra.mxu0 0.0
    %288 = vmatprep.subr.mxu0 0.0
    %289 = vmatpush1.msra.mxu0 0.0
    %290 = vmatprep.subr.mxu0 0.0
    %291 = vmatpush1.msra.mxu0 0.0
    %292 = vmatprep.subr.mxu0 0.0
    %293 = vmatpush1.msra.mxu0 0.0
    %294 = vmatprep.subr.mxu0 0.0
    %295 = vmatpush1.msra.mxu0 0.0
    %296 = vmatprep.mubr.f32.mxu0 0.0
    %297 = vmatmul.mubr.f32.gmra.mrb[0].mxu0 %v226
    %v298 = vpop.f32.mrb[0].mxu0
    %v299 = vadd.f32 %v222, %v298
    %v300 = vpop.f32.mrb[0].mxu0
    %301 = vdwg.mxu0
    %v302 = vxor.u32 %v299, 2147483648
    %v303 = vmul.f32 %v302, 1.442695
    %v304 = vpow.pop %v303
    %v305 = vadd.f32 %v304, 1.0
    %v306 = vrcp.pop %v305
    %v307 = vmul.f32 1.0, %v306
    %v308 = vlaneseq
    %v309 = vshrl.u32 %v308, 7
    %v310 = vsub.s32 0, %v309
    %v311 = vrot.slane %v307, %v310
    %313 = vbcast.lane.b32.xlu0 %v311, 256
    %v314 = vpop.permute.xlu0 %313
    %s316 = sor.u32 256, 8
    %317 = vbcast.lane.b32.xlu0 %v311, %s316
    %v318 = vpop.permute.xlu0 %317
    %s320 = sor.u32 256, 16
    %321 = vbcast.lane.b32.xlu0 %v311, %s320
    %v322 = vpop.permute.xlu0 %321
    %s324 = sor.u32 256, 24
    %325 = vbcast.lane.b32.xlu0 %v311, %s324
    %v326 = vpop.permute.xlu0 %325
    %v327 = vlaneseq
    %v328 = vshrl.u32 %v327, 7
    %v329 = vsub.s32 1, %v328
    %v330 = vrot.slane %v307, %v329
    %332 = vbcast.lane.b32.xlu0 %v330, 256
    %v333 = vpop.permute.xlu0 %332
    %s335 = sor.u32 256, 8
    %336 = vbcast.lane.b32.xlu0 %v330, %s335
    %v337 = vpop.permute.xlu0 %336
    %s339 = sor.u32 256, 16
    %340 = vbcast.lane.b32.xlu0 %v330, %s339
    %v341 = vpop.permute.xlu0 %340
    %s343 = sor.u32 256, 24
    %344 = vbcast.lane.b32.xlu0 %v330, %s343
    %v345 = vpop.permute.xlu0 %344
    %v346 = vmul.f32 %v35, %v314
    %v347 = vmul.f32 %v36, %v314
    %v348 = vmul.f32 %v37, %v318
    %v349 = vmul.f32 %v38, %v318
    %v350 = vmul.f32 %v39, %v322
    %v351 = vmul.f32 %v40, %v322
    %v352 = vmul.f32 %v41, %v326
    %v353 = vmul.f32 %v42, %v326
    %v354 = vmul.f32 %v43, %v333
    %v355 = vmul.f32 %v44, %v333
    %v356 = vmul.f32 %v45, %v337
    %v357 = vmul.f32 %v46, %v337
    %v358 = vmul.f32 %v47, %v341
    %v359 = vmul.f32 %v48, %v341
    %v360 = vmul.f32 %v49, %v345
    %v361 = vmul.f32 %v50, %v345
    %362 = vst [vmem:[#allocation5] sm:$0xff] %v346
    %363 = vst [vmem:[#allocation5 + $0x8] sm:$0xff] %v347
    %364 = vst [vmem:[#allocation5 + $0x10] sm:$0xff] %v348
    %365 = vst [vmem:[#allocation5 + $0x18] sm:$0xff] %v349
    %366 = vst [vmem:[#allocation5 + $0x20] sm:$0xff] %v350
    %367 = vst [vmem:[#allocation5 + $0x28] sm:$0xff] %v351
    %368 = vst [vmem:[#allocation5 + $0x30] sm:$0xff] %v352
    %369 = vst [vmem:[#allocation5 + $0x38] sm:$0xff] %v353
    %370 = vst [vmem:[#allocation5 + $0x40] sm:$0xff] %v354
    %371 = vst [vmem:[#allocation5 + $0x48] sm:$0xff] %v355
    %372 = vst [vmem:[#allocation5 + $0x50] sm:$0xff] %v356
    %373 = vst [vmem:[#allocation5 + $0x58] sm:$0xff] %v357
    %374 = vst [vmem:[#allocation5 + $0x60] sm:$0xff] %v358
    %375 = vst [vmem:[#allocation5 + $0x68] sm:$0xff] %v359
    %376 = vst [vmem:[#allocation5 + $0x70] sm:$0xff] %v360
    %377 = vst [vmem:[#allocation5 + $0x78] sm:$0xff] %v361
    // Predicated region
    $region26: #{tpu_custom_call.1} parent=1 // pred_check
      _
    $region27: #{tpu_custom_call.1} parent=1 // pred_check_branch
      %379 = sbr.rel (0) target = $region29
    $region28: #{tpu_custom_call.1} parent=1 // pred_region
      %s381 = ssub.s32 2048, 2048
      %382 = vsyncadd [#allocation4], %s381
      %s383 = sshll.u32 [#allocation5], 4
      %s384 = int_to_ptr.vmem [resolvable:$true] %s383
      %389 = dma.vmem_to_hbm [thread:$0]  %s384, 2048, %s5, [#allocation4], 256, 256, 16
    $region29: #{tpu_custom_call.1} parent=1 // pred_fallthru
      _
    // Predicated region
    $region30: #{tpu_custom_call.1} parent=1 // pred_check
      _
    $region31: #{tpu_custom_call.1} parent=1 // pred_check_branch
      %391 = sbr.rel (0) target = $region33
    $region32: #{tpu_custom_call.1} parent=1 // pred_region
      %392 = dma.done [#allocation4], 2048
    $region33: #{tpu_custom_call.1} parent=1 // pred_fallthru
      _
    %393 = vsyncpa [#allocation3], 1
    %394 = vsyncpa [#allocation4], 1

</llo_original>
